<compile_context>
chip_gen: v7x
topology: tpu7x:2x2x1
jax: 0.10.0
libtpu: 0.0.40
codegen_flags: <defaults>
</compile_context>

<pallas_src>
import jax
import jax.numpy as jnp
from jax.experimental import pallas as pl
from jax.experimental.pallas import tpu as pltpu

_LANE = 128
_TARGET_TILE_BYTES = 4 * 1024 * 1024   # ~4 MiB tiles: good on v6e/v7x, safe on v5e
_VMEM_LIMIT_BYTES = 32 * 1024 * 1024   # above v5e's 16 MiB default scoped limit


def _hard_swish_kernel(x_ref, o_ref):
    x = x_ref[...]
    # Compute in f32 for reduced-precision float inputs (kernel is DMA-bound,
    # VPU work is free slack); matches the f32 reference more closely.
    if jnp.issubdtype(x.dtype, jnp.floating) and jnp.dtype(x.dtype).itemsize < 4:
        xc = x.astype(jnp.float32)
    else:
        xc = x
    # hard_swish(x) = x * clamp(x + 3, 0, 6) / 6
    gate = jnp.clip(xc + 3.0, 0.0, 6.0) / 6.0
    o_ref[...] = (xc * gate).astype(o_ref.dtype)


def _sublane_multiple(dtype):
    # Min sublane tile: 8 for 32-bit, 16 for 16-bit, 32 for 8-bit dtypes.
    return max(8, 32 // jnp.dtype(dtype).itemsize)


def _tensorcores_per_chip():
    """Best-effort count of TensorCores sharing the grid (v7x = 2). Safe fallback = 1."""
    try:
        info = pltpu.get_tpu_info()
        for attr in ("num_tensorcores", "tensorcore_count", "num_cores", "core_count"):
            v = getattr(info, attr, None)
            if isinstance(v, int) and v >= 1:
                return v
    except Exception:
        pass
    try:
        kind = jax.devices()[0].device_kind.lower()
        if "v7" in kind:
            return 2
    except Exception:
        pass
    return 1


def _choose_tile_rows(rows, lane, dtype, num_cores):
    itemsize = jnp.dtype(dtype).itemsize
    sub = _sublane_multiple(dtype)
    # Rows per tile at the ~4 MiB target, rounded down to a sublane multiple.
    target_rows = max(sub, (_TARGET_TILE_BYTES // (lane * itemsize)) // sub * sub)
    # Minimum number of grid steps that respects the target tile size.
    n_steps = max(1, pl.cdiv(rows, target_rows))
    if num_cores >= 2 and rows >= num_cores * sub:
        # Megacore / v7x: round the step count up to a multiple of the TC
        # count so both cores get a balanced, even share of the grid.
        n_steps = ((n_steps + num_cores - 1) // num_cores) * num_cores
    tile_rows = pl.cdiv(rows, n_steps)
    # Round up to a sublane multiple so the BlockSpec satisfies the (8,128)
    # tiling constraint; a partial final block is handled by Pallas.
    tile_rows = ((tile_rows + sub - 1) // sub) * sub
    return tile_rows


def _hard_swish_2d(x2d, tile_rows):
    rows, lane = x2d.shape
    itemsize = jnp.dtype(x2d.dtype).itemsize
    n = rows * lane
    return pl.pallas_call(
        _hard_swish_kernel,
        out_shape=jax.ShapeDtypeStruct((rows, lane), x2d.dtype),
        grid_spec=pltpu.PrefetchScalarGridSpec(
            num_scalar_prefetch=0,
            grid=(pl.cdiv(rows, tile_rows),),
            in_specs=[pl.BlockSpec((tile_rows, lane), lambda i: (i, 0))],
            out_specs=pl.BlockSpec((tile_rows, lane), lambda i: (i, 0)),
        ),
        compiler_params=pltpu.CompilerParams(
            dimension_semantics=("parallel",),
            vmem_limit_bytes=_VMEM_LIMIT_BYTES,
        ),
        cost_estimate=pl.CostEstimate(
            flops=5 * n,
            transcendentals=0,
            bytes_accessed=2 * n * itemsize,
        ),
    )(x2d)


def hard_swish(x):
    """Elementwise hard-swish on an arbitrary-shape array (NCHW or any)."""
    orig_shape = x.shape
    dtype = x.dtype
    n = x.size
    lane = _LANE
    sub = _sublane_multiple(dtype)
    num_cores = _tensorcores_per_chip()

    if n % lane == 0:
        # Zero-copy hot path: reshapes are free views, no padding / slicing.
        rows = n // lane
        x2d = jnp.reshape(x, (rows, lane))
        tile_rows = _choose_tile_rows(rows, lane, dtype, num_cores)
        out2d = _hard_swish_2d(x2d, tile_rows)
        return jnp.reshape(out2d, orig_shape)

    # Rare fallback (n % 128 != 0): minimal pad to a multiple of (sub * lane).
    # NOTE: this is a known ~3x-HBM-traffic path (jnp.pad materializes a copy
    # and the final slice is another pass); acceptable because it is gated to
    # non-lane-aligned shapes.  Zero padding is benign ONLY because
    # hard_swish(0) == 0 -- revisit if the formula ever changes.
    pad_to = sub * lane
    n_pad = (-n) % pad_to
    x_flat = jnp.reshape(x, (-1,))
    x_flat = jnp.pad(x_flat, (0, n_pad))
    rows = x_flat.size // lane
    x2d = jnp.reshape(x_flat, (rows, lane))
    tile_rows = _choose_tile_rows(rows, lane, dtype, num_cores)
    out2d = _hard_swish_2d(x2d, tile_rows)
    return jnp.reshape(jnp.reshape(out2d, (-1,))[:n], orig_shape)


def hard_swish_ref(x):
    return x * jnp.clip(x + 3.0, 0.0, 6.0) / 6.0


if __name__ == "__main__":
    key = jax.random.PRNGKey(0)
    # NCHW input, same convention as the PyTorch module.
    x = jax.random.normal(key, (2, 4, 16, 16), dtype=jnp.float32) * 4.0

    out = jax.block_until_ready(hard_swish(x))
    ref = hard_swish_ref(x)
    assert out.shape == x.shape and out.dtype == x.dtype
    assert jnp.allclose(out, ref, atol=1e-6, rtol=1e-6)

    # Exercise the (rare) padded fallback path: size not divisible by 128.
    x2 = jax.random.normal(jax.random.PRNGKey(0), (3, 5, 7, 11), dtype=jnp.float32) * 4.0
    out2 = jax.block_until_ready(hard_swish(x2))
    assert out2.shape == x2.shape and out2.dtype == x2.dtype
    assert jnp.allclose(out2, hard_swish_ref(x2), atol=1e-6, rtol=1e-6)

    # Exercise the f32-compute path for bf16 inputs.
    xb = x.astype(jnp.bfloat16)
    outb = jax.block_until_ready(hard_swish(xb))
    refb = hard_swish_ref(xb.astype(jnp.float32)).astype(jnp.bfloat16)
    assert outb.shape == xb.shape and outb.dtype == jnp.bfloat16
    assert jnp.allclose(outb.astype(jnp.float32), refb.astype(jnp.float32),
                        atol=2e-2, rtol=2e-2)

    print("KERNEL_OK")
</pallas_src>

<mosaic_0001>
module attributes {stable_mosaic.version = 11 : i64} {
  func.func @_hard_swish_kernel(%arg0: i32, %arg1: memref<16x128xf32, #tpu.memory_space<vmem>>, %arg2: memref<16x128xf32, #tpu.memory_space<vmem>>) attributes {dimension_semantics = [#tpu.dimension_semantics<parallel>], iteration_bounds = array<i64: 1>, scalar_prefetch = 0 : i64, scratch_operands = 0 : i64, tpu.core_type = #tpu.core_type<tc>, window_params = [{transform_indices = @transform_0, window_bounds = array<i64: 16, 128>}, {transform_indices = @transform_1, window_bounds = array<i64: 16, 128>}]} {
    %c0 = arith.constant 0 : index
    %c0_0 = arith.constant 0 : index
    %0 = vector.load %arg1[%c0, %c0_0] : memref<16x128xf32, #tpu.memory_space<vmem>>, vector<16x128xf32>
    %cst = arith.constant 3.000000e+00 : f32
    %1 = vector.broadcast %cst : f32 to vector<16x128xf32>
    %2 = arith.addf %0, %1 : vector<16x128xf32>
    %cst_1 = arith.constant 0.000000e+00 : f32
    %cst_2 = arith.constant 6.000000e+00 : f32
    %3 = vector.broadcast %cst_1 : f32 to vector<16x128xf32>
    %4 = arith.maximumf %3, %2 : vector<16x128xf32>
    %5 = vector.broadcast %cst_2 : f32 to vector<16x128xf32>
    %6 = arith.minimumf %5, %4 : vector<16x128xf32>
    %cst_3 = arith.constant 6.000000e+00 : f32
    %7 = vector.broadcast %cst_3 : f32 to vector<16x128xf32>
    %8 = arith.divf %6, %7 : vector<16x128xf32>
    %9 = arith.mulf %0, %8 : vector<16x128xf32>
    %c0_4 = arith.constant 0 : index
    %c0_5 = arith.constant 0 : index
    %10 = vector.load %arg2[%c0_4, %c0_5] : memref<16x128xf32, #tpu.memory_space<vmem>>, vector<16x128xf32>
    tpu.vector_store %arg2[%c0_4, %c0_5], %9 {strides = array<i32>} : memref<16x128xf32, #tpu.memory_space<vmem>>, vector<16x128xf32>,
    return
  }
  func.func @transform_0(%arg0: i32) -> (i32, i32) {
    %c0_i32 = arith.constant 0 : i32
    %c0_i32_0 = arith.constant 0 : i32
    return %arg0, %c0_i32 : i32, i32
  }
  func.func @transform_1(%arg0: i32) -> (i32, i32) {
    %c0_i32 = arith.constant 0 : i32
    %c0_i32_0 = arith.constant 0 : i32
    return %arg0, %c0_i32 : i32, i32
  }
}

</mosaic_0001>

<llo_original>
// kernel: tpu_custom_call.1
$region0: #{tpu_custom_call.1}
  #allocation0 [shape = 'u32[]', space=smem, size = 0x4, offset = 0x4, fixed_abs, tag = 'smem constant byte address 0x4 - core index']
  #allocation1 [shape = 'u32[144,128]{1,0:T(1,128)}', space=vmem, size = 0x12000, scoped, tag = 'internal scratch']
  %s0 = inlined_call_operand.hbm [shape: f32[16,128], index: 0, kind: input, shape index: {}]
  %s1 = inlined_call_operand.hbm [shape: f32[16,128], index: 1, kind: output, shape index: {}]
  %s2 = sld [smem:[#allocation0]]
  $region18: #{tpu_custom_call.1} parent=0
    _
  %s4 = ssub.s32 1, %s2
  %s5 = scalar_select 0, %s4, %s2
  $region1: #{tpu_custom_call.1} parent=0
    #allocation2 [shape = 'u8[8192]{0}', space=vmem, size = 0x2000, scoped, tag = 'input window, operand 0, single buffered']
    #allocation3 [shape = 's32[1]{0}', space=sflag, size = 0x4, scoped, tag = 'scoped memory for tpu_custom_call.1']
    #allocation4 [shape = 's32[1]{0}', space=sflag, size = 0x4, scoped, tag = 'scoped memory for tpu_custom_call.1']
    #allocation5 [shape = 'u8[8192]{0}', space=vmem, size = 0x2000, scoped, tag = 'output window, operand 0, single buffered']
    %6 = vsyncpa [#allocation3], 0
    %7 = vsyncpa [#allocation4], 0
    // Predicated region
    $region2: #{tpu_custom_call.1} parent=1 // pred_check
      _
    $region3: #{tpu_custom_call.1} parent=1 // pred_check_branch
      %9 = sbr.rel (0) target = $region5
    $region4: #{tpu_custom_call.1} parent=1 // pred_region
      %s11 = ssub.s32 256, 256
      %12 = vsyncadd [#allocation3], %s11
      %s13 = sshll.u32 [#allocation2], 4
      %s14 = int_to_ptr.vmem [resolvable:$true] %s13
      %19 = dma.hbm_to_vmem [thread:$0]  %s0, 256, %s14, [#allocation3], 128, 128, 8
    $region5: #{tpu_custom_call.1} parent=1 // pred_fallthru
      _
    // Predicated region
    $region6: #{tpu_custom_call.1} parent=1 // pred_check
      _
    $region7: #{tpu_custom_call.1} parent=1 // pred_check_branch
      %21 = sbr.rel (0) target = $region9
    $region8: #{tpu_custom_call.1} parent=1 // pred_region
      %22 = dma.done [#allocation3], 256
    $region9: #{tpu_custom_call.1} parent=1 // pred_fallthru
      _
    %v23 = vld [vmem:[#allocation2] sm:$0xff]
    %v24 = vld [vmem:[#allocation2 + $0x8] sm:$0xff]
    %v25 = vadd.f32 %v23, 3.0
    %v26 = vadd.f32 %v24, 3.0
    %v27 = vmax.f32 %v25, 0.0
    %v28 = vmax.f32 %v26, 0.0
    %v29 = vmin.f32 %v27, 6.0
    %v30 = vmin.f32 %v28, 6.0
    %v31 = vrcp.pop 6.0
    %v32 = vmul.f32 %v29, %v31
    %v33 = vmul.f32 %v30, %v31
    %v34 = vmul.f32 %v23, %v32
    %v35 = vmul.f32 %v24, %v33
    %36 = vst [vmem:[#allocation5] sm:$0xff] %v34
    %37 = vst [vmem:[#allocation5 + $0x8] sm:$0xff] %v35
    // Predicated region
    $region10: #{tpu_custom_call.1} parent=1 // pred_check
      _
    $region11: #{tpu_custom_call.1} parent=1 // pred_check_branch
      %39 = sbr.rel (0) target = $region13
    $region12: #{tpu_custom_call.1} parent=1 // pred_region
      %s41 = ssub.s32 256, 256
      %42 = vsyncadd [#allocation4], %s41
      %s43 = sshll.u32 [#allocation5], 4
      %s44 = int_to_ptr.vmem [resolvable:$true] %s43
      %49 = dma.vmem_to_hbm [thread:$0]  %s44, 256, %s1, [#allocation4], 128, 128, 8
    $region13: #{tpu_custom_call.1} parent=1 // pred_fallthru
      _
    // Predicated region
    $region14: #{tpu_custom_call.1} parent=1 // pred_check
      _
    $region15: #{tpu_custom_call.1} parent=1 // pred_check_branch
      %51 = sbr.rel (0) target = $region17
    $region16: #{tpu_custom_call.1} parent=1 // pred_region
      %52 = dma.done [#allocation4], 256
    $region17: #{tpu_custom_call.1} parent=1 // pred_fallthru
      _
    %53 = vsyncpa [#allocation3], 1
    %54 = vsyncpa [#allocation4], 1

</llo_original>
